<compile_context>
chip_gen: v7x
topology: tpu7x:2x2x1
jax: 0.10.0
libtpu: 0.0.40
codegen_flags: <defaults>
</compile_context>

<pallas_src>
import jax
import jax.numpy as jnp
from jax.experimental import pallas as pl
from jax.experimental.pallas import tpu as pltpu


def _make_copy_rows_kernel(row_splits):
    """Build a kernel that copies the given static (start, size) row ranges
    from the HBM table ref into the HBM output ref with concurrent DMAs."""

    def kernel(emb_ref, out_ref, sem):
        copies = []
        for ci, (start, size) in enumerate(row_splits):
            cp = pltpu.make_async_copy(
                emb_ref.at[pl.ds(start, size), :],
                out_ref.at[pl.ds(start, size), :],
                sem.at[ci],
            )
            cp.start()
            copies.append(cp)
        # Wait after all descriptors are in flight -> overlapping DMAs.
        for cp in copies:
            cp.wait()

    return kernel


def absolute_positional_embedding(emb, seq_len, *, num_dma_chunks=None):
    """emb: (max_seq_len, dim) table; returns (seq_len, dim) == emb[0:seq_len]."""
    max_seq_len, dim = emb.shape
    assert 0 < seq_len <= max_seq_len, "seq_len must be in (0, max_seq_len]"

    # Fast path: full-length positional embedding is the table itself.
    if seq_len == max_seq_len:
        return emb

    itemsize = jnp.dtype(emb.dtype).itemsize
    bytes_moved = seq_len * dim * itemsize

    # 1 DMA for small copies; up to 4 concurrent DMAs for >= 2 MiB copies.
    if num_dma_chunks is None:
        num_dma_chunks = 4 if bytes_moved >= (1 << 21) else 1
    num_dma_chunks = max(1, min(int(num_dma_chunks), seq_len))

    # Static, contiguous, near-equal row ranges.
    base, rem = divmod(seq_len, num_dma_chunks)
    row_splits = []
    start = 0
    for c in range(num_dma_chunks):
        size = base + (1 if c < rem else 0)
        row_splits.append((start, size))
        start += size

    return pl.pallas_call(
        _make_copy_rows_kernel(row_splits),
        out_shape=jax.ShapeDtypeStruct((seq_len, dim), emb.dtype),
        in_specs=[pl.BlockSpec(memory_space=pl.ANY)],   # leave table in HBM
        out_specs=pl.BlockSpec(memory_space=pl.ANY),    # write output directly in HBM
        scratch_shapes=[pltpu.SemaphoreType.DMA((num_dma_chunks,))],
        cost_estimate=pl.CostEstimate(
            flops=0, transcendentals=0, bytes_accessed=2 * bytes_moved
        ),
    )(emb)


class AbsolutePositionalEmbeddingPallas:
    """Mirror of the PyTorch module: holds a (max_seq_len, dim) table."""

    def __init__(self, dim, max_seq_len, key):
        # nn.Embedding default init is N(0, 1); reproduce deterministically.
        self.emb = jax.random.normal(key, (max_seq_len, dim), dtype=jnp.float32)

    def __call__(self, x):
        # Only x.shape[1] (the sequence length) is used, exactly as in PyTorch.
        seq_len = x.shape[1]
        return absolute_positional_embedding(self.emb, seq_len)


if __name__ == "__main__":
    key = jax.random.PRNGKey(0)
    k_emb, k_x, k_emb2, k_emb3 = jax.random.split(key, 4)

    dim = 32
    max_seq_len = 64
    batch, seq = 2, 8

    module = AbsolutePositionalEmbeddingPallas(dim, max_seq_len, k_emb)

    # x plays the role of a (batch, seq) token-id tensor; only its seq axis matters.
    x = jax.random.randint(k_x, (batch, seq), 0, max_seq_len, dtype=jnp.int32)

    out = jax.block_until_ready(module(x))
    ref = module.emb[:seq]
    assert out.shape == (seq, dim), out.shape
    assert out.dtype == jnp.float32, out.dtype
    assert jnp.allclose(out, ref), "mismatch vs reference gather"

    # Fast path: seq_len == max_seq_len (including one not a multiple of 8).
    max_seq_len2, seq2 = 13, 13
    module2 = AbsolutePositionalEmbeddingPallas(dim, max_seq_len2, k_emb2)
    x2 = jnp.zeros((batch, seq2), dtype=jnp.int32)
    out2 = jax.block_until_ready(module2(x2))
    assert out2.shape == (seq2, dim), out2.shape
    assert jnp.allclose(out2, module2.emb[:seq2]), "mismatch on full-length fast path"

    # Odd seq_len strictly inside the table (DMA path, rows not multiple of 8).
    module3 = AbsolutePositionalEmbeddingPallas(dim, 16, k_emb3)
    x3 = jnp.zeros((batch, 13), dtype=jnp.int32)
    out3 = jax.block_until_ready(module3(x3))
    assert out3.shape == (13, dim), out3.shape
    assert jnp.allclose(out3, module3.emb[:13]), "mismatch on odd seq_len"

    # Explicitly exercise the multi-DMA path (4 concurrent chunk copies) at a
    # small size to validate correctness of the chunked kernel.
    out4 = jax.block_until_ready(
        absolute_positional_embedding(module.emb, seq, num_dma_chunks=4)
    )
    assert out4.shape == (seq, dim), out4.shape
    assert jnp.allclose(out4, module.emb[:seq]), "mismatch on multi-DMA path"

    print("KERNEL_OK")
</pallas_src>

<mosaic_0001>
module attributes {stable_mosaic.version = 11 : i64} {
  func.func @kernel(%arg0: memref<64x32xf32, #tpu.memory_space<any>>, %arg1: memref<8x32xf32, #tpu.memory_space<any>>, %arg2: memref<1x!tpu.dma_semaphore, #tpu.memory_space<semaphore_mem>>) attributes {dimension_semantics = [], scalar_prefetch = 0 : i64, scratch_operands = 1 : i64, tpu.core_type = #tpu.core_type<tc>} {
    %c0_i32 = arith.constant 0 : i32
    %c0_i32_0 = arith.constant 0 : i32
    %c0_i32_1 = arith.constant 0 : i32
    %0 = tpu.memref_slice %arg0[%c0_i32_0, %c0_i32_1] : memref<64x32xf32, #tpu.memory_space<any>> -> memref<8x32xf32, #tpu.memory_space<any>>
    %c0_i32_2 = arith.constant 0 : i32
    %c0_i32_3 = arith.constant 0 : i32
    %1 = tpu.memref_slice %arg1[%c0_i32_2, %c0_i32_3] : memref<8x32xf32, #tpu.memory_space<any>> -> memref<8x32xf32, #tpu.memory_space<any>>
    %2 = tpu.memref_slice %arg2[%c0_i32] : memref<1x!tpu.dma_semaphore, #tpu.memory_space<semaphore_mem>> -> memref<1x!tpu.dma_semaphore, #tpu.memory_space<semaphore_mem>>
    %3 = tpu.memref_squeeze %2 : memref<1x!tpu.dma_semaphore, #tpu.memory_space<semaphore_mem>> -> memref<!tpu.dma_semaphore, #tpu.memory_space<semaphore_mem>>
    tpu.enqueue_dma source(%0 : memref<8x32xf32, #tpu.memory_space<any>>) target(%1 : memref<8x32xf32, #tpu.memory_space<any>>) target_semaphore(%3 : memref<!tpu.dma_semaphore, #tpu.memory_space<semaphore_mem>>)
    %c0_i32_4 = arith.constant 0 : i32
    %c0_i32_5 = arith.constant 0 : i32
    %c0_i32_6 = arith.constant 0 : i32
    %4 = tpu.memref_slice %arg0[%c0_i32_5, %c0_i32_6] : memref<64x32xf32, #tpu.memory_space<any>> -> memref<8x32xf32, #tpu.memory_space<any>>
    %c0_i32_7 = arith.constant 0 : i32
    %c0_i32_8 = arith.constant 0 : i32
    %5 = tpu.memref_slice %arg1[%c0_i32_7, %c0_i32_8] : memref<8x32xf32, #tpu.memory_space<any>> -> memref<8x32xf32, #tpu.memory_space<any>>
    %6 = tpu.memref_slice %arg2[%c0_i32_4] : memref<1x!tpu.dma_semaphore, #tpu.memory_space<semaphore_mem>> -> memref<1x!tpu.dma_semaphore, #tpu.memory_space<semaphore_mem>>
    %7 = tpu.memref_squeeze %6 : memref<1x!tpu.dma_semaphore, #tpu.memory_space<semaphore_mem>> -> memref<!tpu.dma_semaphore, #tpu.memory_space<semaphore_mem>>
    tpu.wait_dma2 semaphore(%7 : memref<!tpu.dma_semaphore, #tpu.memory_space<semaphore_mem>>) src(%4 : memref<8x32xf32, #tpu.memory_space<any>>) dst(%5 : memref<8x32xf32, #tpu.memory_space<any>>)
    return
  }
}

</mosaic_0001>

<llo_original>
// kernel: tpu_custom_call.1
$region0: #{tpu_custom_call.1}
  #allocation0 [shape = 'u32[]', space=smem, size = 0x4, offset = 0x4, fixed_abs, tag = 'smem constant byte address 0x4 - core index']
  #allocation1 [shape = 'u32[144,128]{1,0:T(1,128)}', space=vmem, size = 0x12000, scoped, tag = 'internal scratch']
  #allocation2 [shape = 's32[1]{0}', space=sflag, size = 0x4, scoped, tag = 'scratch operand']
  #allocation3 [shape = 's32[]', space=sflag, size = 0x4, offset = 0, fixed_abs, tag = 'sflag constant byte address 0x0 - dummy sync flag']
  #allocation4 [shape = 's32[]', space=sflag, size = 0x4, offset = 0, fixed_abs, tag = 'sflag constant byte address 0x0 - dummy sync flag']
  #allocation5 [shape = 'u32[]', space=smem, size = 0x4, offset = 0x44, fixed_abs, tag = 'smem constant byte address 0x44 - assertion arg 0']
  #allocation6 [shape = 'u32[]', space=smem, size = 0x4, offset = 0x48, fixed_abs, tag = 'smem constant byte address 0x48 - assertion arg 1']
  %s0 = inlined_call_operand.vmem [shape: f32[64,32], index: 0, kind: input, shape index: {}]
  %s1 = inlined_call_operand.hbm [shape: f32[8,32], index: 1, kind: output, shape index: {}]
  %s2 = sld [smem:[#allocation0]]
  $region6: #{tpu_custom_call.1} parent=0
    _
  %s4 = ssub.s32 1, %s2
  %s5 = scalar_select 0, %s4, %s2
  // Predicated region
  $region2: #{tpu_custom_call.1} parent=0 // pred_check
    _
  $region3: #{tpu_custom_call.1} parent=0 // pred_check_branch
    %7 = sbr.rel target = $region5
  $region4: #{tpu_custom_call.1} parent=0 // pred_region
    %8 = sst [smem:[#allocation5]] [#allocation4]
    %9 = sst [smem:[#allocation6]] [#allocation3]
  $region5: #{tpu_custom_call.1} parent=0 // pred_fallthru
    _
  %11 = shalt.err (0)
  %s13 = sshll.u32 %s0, 4
  %s14 = int_to_ptr.vmem [resolvable:$true] %s13
  %16 = dma.vmem_to_hbm [thread:$0]  %s14, 128, %s1, [#allocation2]
  %s17 = smul.u32 8, 1
  %s18 = sshll.u32 %s17, 4
  %19 = dma.done [#allocation2], %s18
  %20 = vsyncmov [#allocation2]
  %s21 = vpop.sfrf %20
  %p22 = scmp.eq.s32.totalorder %s21, 0
  %p23 = pneg %p22
  %25 = shalt.err (%p23)

</llo_original>
